<compile_context>
chip_gen: v6e
topology: v6e:2x2x1
jax: 0.10.0
libtpu: 0.0.40
codegen_flags: <defaults>
</compile_context>

<pallas_src>
import jax
import jax.numpy as jnp
from jax.experimental import pallas as pl
from jax.experimental.pallas import tpu as pltpu


# ---------------------------------------------------------------------------
# Kernel
# ---------------------------------------------------------------------------
def _vecmat_bcast_kernel(tmp_ref, mat_ref, out_ref):
    """out[b, :] = sum_r matrix[b, r, :] * tmp[b, r].

    tmp_ref : (TB, R, 1) f32  — (vector @ W), R on sublanes, lane-broadcast source
    mat_ref : (TB, R, N)      — dominant HBM stream
    out_ref : (TB, N)         — batch on sublanes, lane-dense stores
    """
    prod = mat_ref[...].astype(jnp.float32) * tmp_ref[...]        # VPU broadcast-multiply
    out_ref[...] = jnp.sum(prod, axis=1).astype(out_ref.dtype)    # sublane (R) reduce, XLU


# ---------------------------------------------------------------------------
# Tiling / VMEM sizing helpers (padded to real (sublane, 128) tile footprints)
# ---------------------------------------------------------------------------
def _round_up(x, m):
    return ((x + m - 1) // m) * m


def _sublane(dtype):
    return max(8, 32 // jnp.dtype(dtype).itemsize)


def _padded_block_bytes(shape, dtype):
    """VMEM bytes of one block: last two dims padded to (sublane, 128)."""
    itemsize = jnp.dtype(dtype).itemsize
    *lead, s, l = shape
    n_lead = 1
    for d in lead:
        n_lead *= int(d)
    return n_lead * _round_up(int(s), _sublane(dtype)) * _round_up(int(l), 128) * itemsize


def _blocks_vmem_bytes(tb, R, N, mat_dtype, out_dtype):
    """Double-buffered VMEM footprint of all blocks for a batch tile of size tb."""
    mat = _padded_block_bytes((tb, R, N), mat_dtype)
    tmp = _padded_block_bytes((tb, R, 1), jnp.float32)
    out = _padded_block_bytes((tb, N), out_dtype)
    return 2 * (mat + tmp + out)


def _choose_batch_tile(B, R, N, mat_dtype, out_dtype):
    """Pick the batch tile TB and a generation-aware vmem_limit_bytes."""
    try:
        vmem_cap = int(pltpu.get_tpu_info().vmem_capacity_bytes)
    except Exception:
        vmem_cap = 64 * 1024 * 1024                      # conservative (v7x-sized)
    if vmem_cap <= 64 * 1024 * 1024:                     # v7x-class: 64 MiB / TC
        vmem_limit, budget = 40 << 20, 20 << 20
    else:                                                # v5e / v6e: 128 MiB
        vmem_limit, budget = 64 << 20, 32 << 20

    # Size TB for ~4 MiB of padded per-step matrix DMA (saturation point);
    # do not grow further just to fill VMEM.
    mat_row = _padded_block_bytes((1, R, N), mat_dtype)
    tb = max(1, (4 << 20) // max(mat_row, 1))

    # Megacore (v7x): keep >= 2 roughly balanced grid steps when B allows.
    if B > 8:
        tb = min(tb, _round_up(-(-B // 2), 8))

    if tb >= B or B <= 8:
        tb = B
    else:
        tb = max(8, (tb // 8) * 8)       # multiple of 8 -> (tb, N) out block is layout-legal

    # Respect the double-buffered VMEM budget (padded accounting).
    while tb > 8 and tb < B and _blocks_vmem_bytes(tb, R, N, mat_dtype, out_dtype) > budget:
        tb = max(8, ((tb // 2) // 8) * 8)

    # If a single (clamped) tile still exceeds the base limit, raise it as far as
    # is safe for this generation.
    need = _blocks_vmem_bytes(tb, R, N, mat_dtype, out_dtype)
    if need > vmem_limit:
        vmem_limit = min(need + (8 << 20), int(vmem_cap * 0.9))
    # TODO(synk): tile R and/or N as well when a single batch row's matrix block is
    # too large for VMEM (not needed for typical VectorMatrixLinear shapes).
    return tb, vmem_limit


# ---------------------------------------------------------------------------
# Wrapper
# ---------------------------------------------------------------------------
def vector_matrix_linear(vector: jax.Array, weight: jax.Array, matrix: jax.Array,
                         *, batch_tile: int | None = None) -> jax.Array:
    """output[b] = (vector[b] @ weight) @ matrix[b], shape (B, out_dim)."""
    B, L = vector.shape
    Lw, R = weight.shape
    Bm, Rm, N = matrix.shape
    assert B == Bm and L == Lw and R == Rm

    # Hoisted first matmul: one full-width (B, L) @ (L, R) MXU matmul. Kept f32
    # (no downcast to matrix.dtype) to preserve intermediate precision.
    # TODO(synk): for very small N, fuse this matmul into the kernel (resident
    # weight block) to avoid tmp's HBM round trip.
    tmp = jnp.dot(vector, weight, preferred_element_type=jnp.float32)
    tmp = tmp.astype(jnp.float32).reshape(B, R, 1)       # R on sublanes, lane-broadcastable

    tb, vmem_limit = _choose_batch_tile(B, R, N, matrix.dtype, vector.dtype)
    if batch_tile is not None:                           # user override (sanitized)
        tb = min(int(batch_tile), B)
        if tb < B and B > 8:
            tb = max(8, (tb // 8) * 8)

    grid = (pl.cdiv(B, tb),)

    itemsize_m = jnp.dtype(matrix.dtype).itemsize
    itemsize_o = jnp.dtype(vector.dtype).itemsize
    cost = pl.CostEstimate(
        flops=2 * B * R * N,
        transcendentals=0,
        bytes_accessed=itemsize_m * B * R * N + 4 * B * R + itemsize_o * B * N,
    )

    # TODO(synk): if precision allows, stream matrix (and tmp) as bf16 and widen to
    # f32 in-kernel (~1.9x at HBM roofline); on v7x consider
    # pipeline_mode=pl.Buffered(3) on the matrix BlockSpec if profiling shows
    # exposed DMA at tile boundaries.
    out = pl.pallas_call(
        _vecmat_bcast_kernel,
        out_shape=jax.ShapeDtypeStruct((B, N), vector.dtype),
        grid_spec=pltpu.PrefetchScalarGridSpec(
            num_scalar_prefetch=0,
            grid=grid,
            in_specs=[
                pl.BlockSpec((tb, R, 1), lambda b: (b, 0, 0)),   # (vector @ W), f32
                pl.BlockSpec((tb, R, N), lambda b: (b, 0, 0)),   # matrix (dominant stream)
            ],
            out_specs=pl.BlockSpec((tb, N), lambda b: (b, 0)),   # lane-dense 2-D output
        ),
        compiler_params=pltpu.CompilerParams(
            dimension_semantics=("parallel",),    # batch tiles shard across TCs (v7x)
            vmem_limit_bytes=vmem_limit,
        ),
        cost_estimate=cost,
    )(tmp, matrix)

    return out


def init_weight(key, left_dim: int, right_dim: int, dtype=jnp.float32) -> jax.Array:
    # torch.nn.init.xavier_normal_: std = sqrt(2 / (fan_in + fan_out))
    std = (2.0 / (left_dim + right_dim)) ** 0.5
    return (jax.random.normal(key, (left_dim, right_dim)) * std).astype(dtype)


if __name__ == "__main__":
    B, LEFT, RIGHT, OUT = 2, 32, 16, 8

    key = jax.random.PRNGKey(0)
    k_w, k_v, k_m = jax.random.split(key, 3)

    weight = init_weight(k_w, LEFT, RIGHT)
    vector = jax.random.normal(k_v, (B, LEFT), dtype=jnp.float32)
    matrix = jax.random.normal(k_m, (B, RIGHT, OUT), dtype=jnp.float32)

    out = vector_matrix_linear(vector, weight, matrix)
    out = jax.block_until_ready(out)

    # Pure-JAX reference
    ref = jnp.einsum("br,brn->bn", vector @ weight, matrix)
    assert out.shape == (B, OUT)
    assert jnp.allclose(out, ref, atol=1e-5, rtol=1e-5), "mismatch vs reference"

    print("KERNEL_OK")
</pallas_src>

<mosaic_0001>
module attributes {stable_mosaic.version = 11 : i64} {
  func.func @_vecmat_bcast_kernel(%arg0: i32, %arg1: memref<2x16x1xf32, #tpu.memory_space<vmem>>, %arg2: memref<2x16x8xf32, #tpu.memory_space<vmem>>, %arg3: memref<2x8xf32, #tpu.memory_space<vmem>>) attributes {dimension_semantics = [#tpu.dimension_semantics<parallel>], iteration_bounds = array<i64: 1>, scalar_prefetch = 0 : i64, scratch_operands = 0 : i64, tpu.core_type = #tpu.core_type<tc>, window_params = [{transform_indices = @transform_0, window_bounds = array<i64: 2, 16, 1>}, {transform_indices = @transform_1, window_bounds = array<i64: 2, 16, 8>}, {transform_indices = @transform_2, window_bounds = array<i64: 2, 8>}]} {
    %c0 = arith.constant 0 : index
    %c0_0 = arith.constant 0 : index
    %c0_1 = arith.constant 0 : index
    %0 = vector.load %arg2[%c0, %c0_0, %c0_1] : memref<2x16x8xf32, #tpu.memory_space<vmem>>, vector<2x16x8xf32>
    %c0_2 = arith.constant 0 : index
    %c0_3 = arith.constant 0 : index
    %c0_4 = arith.constant 0 : index
    %1 = vector.load %arg1[%c0_2, %c0_3, %c0_4] : memref<2x16x1xf32, #tpu.memory_space<vmem>>, vector<2x16x1xf32>
    %2 = vector.broadcast %1 : vector<2x16x1xf32> to vector<2x16x8xf32>
    %3 = arith.mulf %0, %2 : vector<2x16x8xf32>
    %cst = arith.constant dense<0.000000e+00> : vector<2x8xf32>
    %4 = vector.multi_reduction <add>, %3, %cst [1] : vector<2x16x8xf32> to vector<2x8xf32>
    %c0_5 = arith.constant 0 : index
    %c0_6 = arith.constant 0 : index
    %5 = vector.load %arg3[%c0_5, %c0_6] : memref<2x8xf32, #tpu.memory_space<vmem>>, vector<2x8xf32>
    tpu.vector_store %arg3[%c0_5, %c0_6], %4 {strides = array<i32>} : memref<2x8xf32, #tpu.memory_space<vmem>>, vector<2x8xf32>,
    return
  }
  func.func @transform_0(%arg0: i32) -> (i32, i32, i32) {
    %c0_i32 = arith.constant 0 : i32
    %c0_i32_0 = arith.constant 0 : i32
    %c0_i32_1 = arith.constant 0 : i32
    return %arg0, %c0_i32, %c0_i32_0 : i32, i32, i32
  }
  func.func @transform_1(%arg0: i32) -> (i32, i32, i32) {
    %c0_i32 = arith.constant 0 : i32
    %c0_i32_0 = arith.constant 0 : i32
    %c0_i32_1 = arith.constant 0 : i32
    return %arg0, %c0_i32, %c0_i32_0 : i32, i32, i32
  }
  func.func @transform_2(%arg0: i32) -> (i32, i32) {
    %c0_i32 = arith.constant 0 : i32
    %c0_i32_0 = arith.constant 0 : i32
    return %arg0, %c0_i32 : i32, i32
  }
}

</mosaic_0001>

<llo_original>
// kernel: tpu_custom_call.1
$region0: #{tpu_custom_call.1}
  #allocation0 [shape = 'u32[]', space=smem, size = 0x4, offset = 0x4, fixed_abs, tag = 'smem constant byte address 0x4 - core index']
  #allocation1 [shape = 'u32[144,128]{1,0:T(1,128)}', space=vmem, size = 0x12000, scoped, tag = 'internal scratch']
  %s0 = inlined_call_operand.vmem [shape: f32[2,16,1], index: 0, kind: input, shape index: {}]
  %s1 = inlined_call_operand.vmem [shape: f32[2,16,8], index: 1, kind: input, shape index: {}]
  %s2 = inlined_call_operand.hbm [shape: f32[2,8], index: 2, kind: output, shape index: {}]
  %s3 = sld [smem:[#allocation0]]
  $region18: #{tpu_custom_call.1} parent=0
    _
  %s5 = ssub.s32 1, %s3
  %s6 = scalar_select 0, %s5, %s3
  $region1: #{tpu_custom_call.1} parent=0
    #allocation2 [shape = 'u8[1024]{0}', space=vmem, size = 0x400, scoped, tag = 'output window, operand 0, single buffered']
    #allocation3 [shape = 's32[1]{0}', space=sflag, size = 0x4, scoped, tag = 'scoped memory for tpu_custom_call.1']
    %7 = vsyncpa [#allocation3], 0
    // Predicated region
    $region2: #{tpu_custom_call.1} parent=1 // pred_check
      _
    $region3: #{tpu_custom_call.1} parent=1 // pred_check_branch
      %9 = sbr.rel (0) target = $region5
    $region4: #{tpu_custom_call.1} parent=1 // pred_region
      _
    $region5: #{tpu_custom_call.1} parent=1 // pred_fallthru
      _
    // Predicated region
    $region6: #{tpu_custom_call.1} parent=1 // pred_check
      _
    $region7: #{tpu_custom_call.1} parent=1 // pred_check_branch
      %11 = sbr.rel (0) target = $region9
    $region8: #{tpu_custom_call.1} parent=1 // pred_region
      _
    $region9: #{tpu_custom_call.1} parent=1 // pred_fallthru
      _
    %v12 = vld [vmem:[%s1] sm:$0xff]
    %v13 = vld [vmem:[%s1 + $0x8] sm:$0xff]
    %v14 = vld [vmem:[%s1 + $0x10] sm:$0xff]
    %v15 = vld [vmem:[%s1 + $0x18] sm:$0xff]
    %v16 = vld [vmem:[%s0] sm:$0xff]
    %v17 = vld [vmem:[%s0 + $0x8] sm:$0xff]
    %v18 = vld [vmem:[%s0 + $0x10] sm:$0xff]
    %v19 = vld [vmem:[%s0 + $0x18] sm:$0xff]
    %21 = vset.pattern.permute.xlu0 0
    %22 = vperm.xlu0 %21, %v16
    %v23 = vpop.permute.xlu0 %22
    %26 = vset.pattern.permute.xlu0 0
    %27 = vperm.xlu0 %26, %v17
    %v28 = vpop.permute.xlu0 %27
    %31 = vset.pattern.permute.xlu0 0
    %32 = vperm.xlu0 %31, %v18
    %v33 = vpop.permute.xlu0 %32
    %36 = vset.pattern.permute.xlu0 0
    %37 = vperm.xlu0 %36, %v19
    %v38 = vpop.permute.xlu0 %37
    %v40 = vmul.f32 %v12, %v23
    %v41 = vmul.f32 %v13, %v28
    %v42 = vmul.f32 %v14, %v33
    %v43 = vmul.f32 %v15, %v38
    %vm44 = vcmask 64512
    %v45 = vsel %vm44, %v40, 0.0
    %v46 = vsel %vm44, %v41, 0.0
    %v47 = vadd.f32 %v45, %v46
    %v48 = vrot.slane %v47, 4
    %v49 = vadd.f32 %v47, %v48
    %v50 = vrot.slane %v49, 2
    %v51 = vadd.f32 %v49, %v50
    %v52 = vrot.slane %v51, 1
    %v53 = vadd.f32 %v51, %v52
    %v54 = vsel %vm44, %v42, 0.0
    %v55 = vsel %vm44, %v43, 0.0
    %v56 = vadd.f32 %v54, %v55
    %v57 = vrot.slane %v56, 4
    %v58 = vadd.f32 %v56, %v57
    %v59 = vrot.slane %v58, 2
    %v60 = vadd.f32 %v58, %v59
    %v61 = vrot.slane %v60, 1
    %v62 = vadd.f32 %v60, %v61
    %vm65 = vcmask 1041409
    %v66 = vsel %vm65, %v62, %v53
    %vm68 = vcmask 58368
    %69 = vst.msk [vmem:[#allocation2] sm:$0x3] %vm68, %v66
    // Predicated region
    $region10: #{tpu_custom_call.1} parent=1 // pred_check
      _
    $region11: #{tpu_custom_call.1} parent=1 // pred_check_branch
      %71 = sbr.rel (0) target = $region13
    $region12: #{tpu_custom_call.1} parent=1 // pred_region
      %s73 = ssub.s32 32, 32
      %74 = vsyncadd [#allocation3], %s73
      %s76 = sshll.u32 [#allocation2], 4
      %s77 = int_to_ptr.vmem [resolvable:$true] %s76
      %79 = dma.vmem_to_hbm [thread:$0]  %s77, 32, %s2, [#allocation3]
    $region13: #{tpu_custom_call.1} parent=1 // pred_fallthru
      _
    // Predicated region
    $region14: #{tpu_custom_call.1} parent=1 // pred_check
      _
    $region15: #{tpu_custom_call.1} parent=1 // pred_check_branch
      %81 = sbr.rel (0) target = $region17
    $region16: #{tpu_custom_call.1} parent=1 // pred_region
      %82 = dma.done [#allocation3], 32
    $region17: #{tpu_custom_call.1} parent=1 // pred_fallthru
      _
    %83 = vsyncpa [#allocation3], 1

</llo_original>
